<compile_context>
chip_gen: v5e
topology: v5e:2x2
jax: 0.10.0
libtpu: 0.0.40
codegen_flags: <defaults>
</compile_context>

<pallas_src>
import functools
import math

import jax
import jax.numpy as jnp
from jax.experimental import pallas as pl
from jax.experimental.pallas import tpu as pltpu


def _round_up(x, m):
    return ((x + m - 1) // m) * m


def _vmem_capacity_bytes():
    try:
        info = pltpu.get_tpu_info()
        cap = getattr(info, "vmem_capacity_bytes", None)
        if cap:
            return int(cap)
    except Exception:
        pass
    return 64 * 1024 * 1024  # conservative default: fits every TPU generation


# --------------------------------------------------------------------------
# Kernels
# --------------------------------------------------------------------------
def _ln_body(x_ref, o_ref, g_ref, b_ref, *, eps, feat, groups, affine):
    x = x_ref[...].astype(jnp.float32)               # (tr, groups*feat)
    if groups == 1:
        mean = jnp.mean(x, axis=-1, keepdims=True)
        d = x - mean
        var = jnp.mean(d * d, axis=-1, keepdims=True)
        xn = d * jax.lax.rsqrt(var + eps)
    else:
        packed = groups * feat
        lane = jax.lax.broadcasted_iota(jnp.int32, (1, packed), 1)
        masks = [(lane >= g * feat) & (lane < (g + 1) * feat)
                 for g in range(groups)]
        inv_f = 1.0 / feat
        # Segmented (per original row) mean, broadcast back to its lanes.
        mean_b = jnp.zeros_like(x)
        for m in masks:
            mg = jnp.sum(jnp.where(m, x, 0.0), axis=-1, keepdims=True) * inv_f
            mean_b = jnp.where(m, mg, mean_b)
        d = x - mean_b
        d2 = d * d
        # Segmented variance -> rsqrt scale, broadcast back to lanes.
        inv_b = jnp.zeros_like(x)
        for m in masks:
            vg = jnp.sum(jnp.where(m, d2, 0.0), axis=-1, keepdims=True) * inv_f
            inv_b = jnp.where(m, jax.lax.rsqrt(vg + eps), inv_b)
        xn = d * inv_b
    if affine:
        xn = g_ref[...].astype(jnp.float32) * xn + b_ref[...].astype(jnp.float32)
    o_ref[...] = xn.astype(o_ref.dtype)


def _ln_kernel_affine(x_ref, g_ref, b_ref, o_ref, *, eps, feat, groups):
    _ln_body(x_ref, o_ref, g_ref, b_ref,
             eps=eps, feat=feat, groups=groups, affine=True)


def _ln_kernel_noaffine(x_ref, o_ref, *, eps, feat, groups):
    _ln_body(x_ref, o_ref, None, None,
             eps=eps, feat=feat, groups=groups, affine=False)


# --------------------------------------------------------------------------
# Wrapper
# --------------------------------------------------------------------------
def layer_norm(x, normalized_shape, gain=None, bias=None, *, eps=1e-5,
               elementwise_affine=True):
    """LayerNorm matching the PyTorch module's forward semantics."""
    normalized_shape = tuple(int(d) for d in normalized_shape)
    n_norm = len(normalized_shape)
    assert x.shape[-n_norm:] == normalized_shape, "trailing dims must match"

    lead_shape = x.shape[:-n_norm]
    rows = math.prod(lead_shape) if lead_shape else 1
    feat = math.prod(normalized_shape)

    # Lane-packing factor: fold `groups` rows into one lane-dense packed row.
    # Bounded to feat >= 8 so the static per-group unroll stays <= 16.
    if 8 <= feat < 128 and 128 % feat == 0:
        groups = 128 // feat
    else:
        groups = 1
    # TODO(synk): feat < 8, or feat that neither reaches 128 nor divides 128,
    # stays lane-sparse; lcm-based packing / transposed layout could cover it.
    packed_feat = groups * feat

    # Row tile from an explicit VMEM budget.
    itemsize = jnp.dtype(x.dtype).itemsize
    vmem_cap = _vmem_capacity_bytes()
    budget = vmem_cap // 4                              # headroom for pipelining
    bytes_per_packed_row = packed_feat * itemsize * 2 * 2   # in+out, double-buffered
    tr = budget // max(bytes_per_packed_row, 1)
    tr = max(8, min(int(tr), 4096))
    tr = (tr // 8) * 8
    # TODO(synk): for extremely large feat (one 8-row tile over the VMEM budget)
    # a feature-axis grid with running-sum scratch would be required.

    packed_rows = -(-rows // groups)                    # ceil(rows / groups)
    tr = min(tr, _round_up(packed_rows, 8))
    tr = max(8, (tr // 8) * 8)

    padded_packed = _round_up(packed_rows, tr)
    padded_rows = padded_packed * groups
    grid = (padded_packed // tr,)

    # Contiguous reshapes / zero-pad (padded rows are independent junk rows,
    # sliced off after the call).
    x2d = x.reshape(rows, feat)
    if padded_rows != rows:
        x2d = jnp.pad(x2d, ((0, padded_rows - rows), (0, 0)))
    xp = x2d.reshape(padded_packed, packed_feat)

    vmem_needed = (2 * 2 * tr * packed_feat * itemsize      # x + out, double-buffered
                   + 4 * packed_feat * 4)                   # gain + bias
    vmem_limit = int(min(vmem_cap, max(vmem_needed + (8 << 20), 32 << 20)))
    cparams = pltpu.CompilerParams(
        dimension_semantics=("parallel",),
        vmem_limit_bytes=vmem_limit)

    row_spec = pl.BlockSpec((tr, packed_feat), lambda i: (i, 0))
    par_spec = pl.BlockSpec((1, packed_feat), lambda i: (0, 0))
    out_shape = jax.ShapeDtypeStruct((padded_packed, packed_feat), x.dtype)

    if elementwise_affine:
        g_tiled = jnp.tile(gain.reshape(-1), groups).reshape(1, packed_feat)
        b_tiled = jnp.tile(bias.reshape(-1), groups).reshape(1, packed_feat)
        outp = pl.pallas_call(
            functools.partial(_ln_kernel_affine, eps=eps, feat=feat,
                              groups=groups),
            out_shape=out_shape,
            grid_spec=pltpu.PrefetchScalarGridSpec(
                num_scalar_prefetch=0,
                grid=grid,
                in_specs=[row_spec, par_spec, par_spec],
                out_specs=row_spec),
            compiler_params=cparams,
        )(xp, g_tiled, b_tiled)
    else:
        outp = pl.pallas_call(
            functools.partial(_ln_kernel_noaffine, eps=eps, feat=feat,
                              groups=groups),
            out_shape=out_shape,
            grid_spec=pltpu.PrefetchScalarGridSpec(
                num_scalar_prefetch=0,
                grid=grid,
                in_specs=[row_spec],
                out_specs=row_spec),
            compiler_params=cparams,
        )(xp)

    out2d = outp.reshape(padded_rows, feat)[:rows]
    return out2d.reshape(x.shape)


# --------------------------------------------------------------------------
# Pure-JAX reference mirroring the PyTorch forward exactly.
# --------------------------------------------------------------------------
def layer_norm_ref(x, normalized_shape, gain=None, bias=None, *, eps=1e-5,
                   elementwise_affine=True):
    n = len(normalized_shape)
    dims = tuple(range(x.ndim - n, x.ndim))
    xf = x.astype(jnp.float32)
    mean = jnp.mean(xf, axis=dims, keepdims=True)
    mean_x2 = jnp.mean(xf * xf, axis=dims, keepdims=True)
    var = mean_x2 - mean * mean
    x_norm = (xf - mean) / jnp.sqrt(var + eps)
    if elementwise_affine:
        x_norm = gain.astype(jnp.float32) * x_norm + bias.astype(jnp.float32)
    return x_norm.astype(x.dtype)


if __name__ == "__main__":
    key = jax.random.PRNGKey(0)
    k1, k2, k3, k4 = jax.random.split(key, 4)

    # NLP-style input [seq_len, batch_size, features]; small feature dim (32)
    # exercises the lane-packed (groups=4) path with non-trivial gain/bias.
    seq_len, batch, hidden = 8, 2, 32
    x_a = jax.random.normal(k1, (seq_len, batch, hidden), dtype=jnp.float32)
    gain_a = 1.0 + 0.1 * jax.random.normal(k2, (hidden,), dtype=jnp.float32)
    bias_a = 0.1 * jax.random.normal(k3, (hidden,), dtype=jnp.float32)

    out_a = layer_norm(x_a, (hidden,), gain_a, bias_a, eps=1e-5,
                       elementwise_affine=True)
    out_a = jax.block_until_ready(out_a)
    ref_a = layer_norm_ref(x_a, (hidden,), gain_a, bias_a, eps=1e-5,
                           elementwise_affine=True)
    assert out_a.shape == x_a.shape and out_a.dtype == x_a.dtype
    assert jnp.allclose(out_a, ref_a, atol=1e-5, rtol=1e-5), "affine mismatch"

    # Wider feature dim exercises the simple (groups=1) path, no affine.
    x_b = jax.random.normal(k4, (4, 3, 128), dtype=jnp.float32)
    out_b = layer_norm(x_b, (128,), eps=1e-5, elementwise_affine=False)
    out_b = jax.block_until_ready(out_b)
    ref_b = layer_norm_ref(x_b, (128,), eps=1e-5, elementwise_affine=False)
    assert out_b.shape == x_b.shape and out_b.dtype == x_b.dtype
    assert jnp.allclose(out_b, ref_b, atol=1e-5, rtol=1e-5), "no-affine mismatch"

    print("KERNEL_OK")
</pallas_src>

<mosaic_0001>
module attributes {stable_mosaic.version = 11 : i64} {
  func.func @_ln_kernel_affine(%arg0: i32, %arg1: memref<8x128xf32, #tpu.memory_space<vmem>>, %arg2: memref<1x128xf32, #tpu.memory_space<vmem>>, %arg3: memref<1x128xf32, #tpu.memory_space<vmem>>, %arg4: memref<8x128xf32, #tpu.memory_space<vmem>>) attributes {dimension_semantics = [#tpu.dimension_semantics<parallel>], iteration_bounds = array<i64: 1>, scalar_prefetch = 0 : i64, scratch_operands = 0 : i64, tpu.core_type = #tpu.core_type<tc>, window_params = [{transform_indices = @transform_0, window_bounds = array<i64: 8, 128>}, {pipeline_mode = #tpu.pipeline_mode<synchronous>, transform_indices = @transform_1, window_bounds = array<i64: 1, 128>}, {pipeline_mode = #tpu.pipeline_mode<synchronous>, transform_indices = @transform_2, window_bounds = array<i64: 1, 128>}, {transform_indices = @transform_3, window_bounds = array<i64: 8, 128>}]} {
    %c0 = arith.constant 0 : index
    %c0_0 = arith.constant 0 : index
    %0 = vector.load %arg1[%c0, %c0_0] : memref<8x128xf32, #tpu.memory_space<vmem>>, vector<8x128xf32>
    %1 = tpu.iota {dimensions = array<i32: 1>} : vector<1x128xi32>
    %c0_i32 = arith.constant 0 : i32
    %2 = vector.broadcast %c0_i32 : i32 to vector<1x128xi32>
    %3 = arith.cmpi sge, %1, %2 : vector<1x128xi32>
    %c32_i32 = arith.constant 32 : i32
    %4 = vector.broadcast %c32_i32 : i32 to vector<1x128xi32>
    %5 = arith.cmpi slt, %1, %4 : vector<1x128xi32>
    %6 = arith.andi %3, %5 : vector<1x128xi1>
    %c32_i32_1 = arith.constant 32 : i32
    %7 = vector.broadcast %c32_i32_1 : i32 to vector<1x128xi32>
    %8 = arith.cmpi sge, %1, %7 : vector<1x128xi32>
    %c64_i32 = arith.constant 64 : i32
    %9 = vector.broadcast %c64_i32 : i32 to vector<1x128xi32>
    %10 = arith.cmpi slt, %1, %9 : vector<1x128xi32>
    %11 = arith.andi %8, %10 : vector<1x128xi1>
    %c64_i32_2 = arith.constant 64 : i32
    %12 = vector.broadcast %c64_i32_2 : i32 to vector<1x128xi32>
    %13 = arith.cmpi sge, %1, %12 : vector<1x128xi32>
    %c96_i32 = arith.constant 96 : i32
    %14 = vector.broadcast %c96_i32 : i32 to vector<1x128xi32>
    %15 = arith.cmpi slt, %1, %14 : vector<1x128xi32>
    %16 = arith.andi %13, %15 : vector<1x128xi1>
    %c96_i32_3 = arith.constant 96 : i32
    %17 = vector.broadcast %c96_i32_3 : i32 to vector<1x128xi32>
    %18 = arith.cmpi sge, %1, %17 : vector<1x128xi32>
    %c128_i32 = arith.constant 128 : i32
    %19 = vector.broadcast %c128_i32 : i32 to vector<1x128xi32>
    %20 = arith.cmpi slt, %1, %19 : vector<1x128xi32>
    %21 = arith.andi %18, %20 : vector<1x128xi1>
    %cst = arith.constant 0.000000e+00 : f32
    %22 = vector.broadcast %cst : f32 to vector<8x128xf32>
    %cst_4 = arith.constant 0.000000e+00 : f32
    %23 = vector.shape_cast %6 : vector<1x128xi1> to vector<1x128xi1>
    %24 = vector.broadcast %23 : vector<1x128xi1> to vector<8x128xi1>
    %25 = vector.broadcast %cst_4 : f32 to vector<8x128xf32>
    %26 = arith.select %24, %0, %25 : vector<8x128xi1>, vector<8x128xf32>
    %cst_5 = arith.constant dense<0.000000e+00> : vector<8xf32>
    %27 = vector.multi_reduction <add>, %26, %cst_5 [1] : vector<8x128xf32> to vector<8xf32>
    %28 = vector.shape_cast %27 : vector<8xf32> to vector<8x1xf32>
    %cst_6 = arith.constant 3.125000e-02 : f32
    %29 = vector.broadcast %cst_6 : f32 to vector<8x1xf32>
    %30 = arith.mulf %28, %29 : vector<8x1xf32>
    %31 = vector.shape_cast %6 : vector<1x128xi1> to vector<1x128xi1>
    %32 = vector.broadcast %31 : vector<1x128xi1> to vector<8x128xi1>
    %33 = vector.shape_cast %30 : vector<8x1xf32> to vector<8x1xf32>
    %34 = vector.broadcast %33 : vector<8x1xf32> to vector<8x128xf32>
    %35 = arith.select %32, %34, %22 : vector<8x128xi1>, vector<8x128xf32>
    %cst_7 = arith.constant 0.000000e+00 : f32
    %36 = vector.shape_cast %11 : vector<1x128xi1> to vector<1x128xi1>
    %37 = vector.broadcast %36 : vector<1x128xi1> to vector<8x128xi1>
    %38 = vector.broadcast %cst_7 : f32 to vector<8x128xf32>
    %39 = arith.select %37, %0, %38 : vector<8x128xi1>, vector<8x128xf32>
    %cst_8 = arith.constant dense<0.000000e+00> : vector<8xf32>
    %40 = vector.multi_reduction <add>, %39, %cst_8 [1] : vector<8x128xf32> to vector<8xf32>
    %41 = vector.shape_cast %40 : vector<8xf32> to vector<8x1xf32>
    %cst_9 = arith.constant 3.125000e-02 : f32
    %42 = vector.broadcast %cst_9 : f32 to vector<8x1xf32>
    %43 = arith.mulf %41, %42 : vector<8x1xf32>
    %44 = vector.shape_cast %11 : vector<1x128xi1> to vector<1x128xi1>
    %45 = vector.broadcast %44 : vector<1x128xi1> to vector<8x128xi1>
    %46 = vector.shape_cast %43 : vector<8x1xf32> to vector<8x1xf32>
    %47 = vector.broadcast %46 : vector<8x1xf32> to vector<8x128xf32>
    %48 = arith.select %45, %47, %35 : vector<8x128xi1>, vector<8x128xf32>
    %cst_10 = arith.constant 0.000000e+00 : f32
    %49 = vector.shape_cast %16 : vector<1x128xi1> to vector<1x128xi1>
    %50 = vector.broadcast %49 : vector<1x128xi1> to vector<8x128xi1>
    %51 = vector.broadcast %cst_10 : f32 to vector<8x128xf32>
    %52 = arith.select %50, %0, %51 : vector<8x128xi1>, vector<8x128xf32>
    %cst_11 = arith.constant dense<0.000000e+00> : vector<8xf32>
    %53 = vector.multi_reduction <add>, %52, %cst_11 [1] : vector<8x128xf32> to vector<8xf32>
    %54 = vector.shape_cast %53 : vector<8xf32> to vector<8x1xf32>
    %cst_12 = arith.constant 3.125000e-02 : f32
    %55 = vector.broadcast %cst_12 : f32 to vector<8x1xf32>
    %56 = arith.mulf %54, %55 : vector<8x1xf32>
    %57 = vector.shape_cast %16 : vector<1x128xi1> to vector<1x128xi1>
    %58 = vector.broadcast %57 : vector<1x128xi1> to vector<8x128xi1>
    %59 = vector.shape_cast %56 : vector<8x1xf32> to vector<8x1xf32>
    %60 = vector.broadcast %59 : vector<8x1xf32> to vector<8x128xf32>
    %61 = arith.select %58, %60, %48 : vector<8x128xi1>, vector<8x128xf32>
    %cst_13 = arith.constant 0.000000e+00 : f32
    %62 = vector.shape_cast %21 : vector<1x128xi1> to vector<1x128xi1>
    %63 = vector.broadcast %62 : vector<1x128xi1> to vector<8x128xi1>
    %64 = vector.broadcast %cst_13 : f32 to vector<8x128xf32>
    %65 = arith.select %63, %0, %64 : vector<8x128xi1>, vector<8x128xf32>
    %cst_14 = arith.constant dense<0.000000e+00> : vector<8xf32>
    %66 = vector.multi_reduction <add>, %65, %cst_14 [1] : vector<8x128xf32> to vector<8xf32>
    %67 = vector.shape_cast %66 : vector<8xf32> to vector<8x1xf32>
    %cst_15 = arith.constant 3.125000e-02 : f32
    %68 = vector.broadcast %cst_15 : f32 to vector<8x1xf32>
    %69 = arith.mulf %67, %68 : vector<8x1xf32>
    %70 = vector.shape_cast %21 : vector<1x128xi1> to vector<1x128xi1>
    %71 = vector.broadcast %70 : vector<1x128xi1> to vector<8x128xi1>
    %72 = vector.shape_cast %69 : vector<8x1xf32> to vector<8x1xf32>
    %73 = vector.broadcast %72 : vector<8x1xf32> to vector<8x128xf32>
    %74 = arith.select %71, %73, %61 : vector<8x128xi1>, vector<8x128xf32>
    %75 = arith.subf %0, %74 : vector<8x128xf32>
    %76 = arith.mulf %75, %75 : vector<8x128xf32>
    %cst_16 = arith.constant 0.000000e+00 : f32
    %77 = vector.broadcast %cst_16 : f32 to vector<8x128xf32>
    %cst_17 = arith.constant 0.000000e+00 : f32
    %78 = vector.shape_cast %6 : vector<1x128xi1> to vector<1x128xi1>
    %79 = vector.broadcast %78 : vector<1x128xi1> to vector<8x128xi1>
    %80 = vector.broadcast %cst_17 : f32 to vector<8x128xf32>
    %81 = arith.select %79, %76, %80 : vector<8x128xi1>, vector<8x128xf32>
    %cst_18 = arith.constant dense<0.000000e+00> : vector<8xf32>
    %82 = vector.multi_reduction <add>, %81, %cst_18 [1] : vector<8x128xf32> to vector<8xf32>
    %83 = vector.shape_cast %82 : vector<8xf32> to vector<8x1xf32>
    %cst_19 = arith.constant 3.125000e-02 : f32
    %84 = vector.broadcast %cst_19 : f32 to vector<8x1xf32>
    %85 = arith.mulf %83, %84 : vector<8x1xf32>
    %cst_20 = arith.constant 9.99999974E-6 : f32
    %86 = vector.broadcast %cst_20 : f32 to vector<8x1xf32>
    %87 = arith.addf %85, %86 : vector<8x1xf32>
    %88 = math.rsqrt %87 : vector<8x1xf32>
    %89 = vector.shape_cast %6 : vector<1x128xi1> to vector<1x128xi1>
    %90 = vector.broadcast %89 : vector<1x128xi1> to vector<8x128xi1>
    %91 = vector.shape_cast %88 : vector<8x1xf32> to vector<8x1xf32>
    %92 = vector.broadcast %91 : vector<8x1xf32> to vector<8x128xf32>
    %93 = arith.select %90, %92, %77 : vector<8x128xi1>, vector<8x128xf32>
    %cst_21 = arith.constant 0.000000e+00 : f32
    %94 = vector.shape_cast %11 : vector<1x128xi1> to vector<1x128xi1>
    %95 = vector.broadcast %94 : vector<1x128xi1> to vector<8x128xi1>
    %96 = vector.broadcast %cst_21 : f32 to vector<8x128xf32>
    %97 = arith.select %95, %76, %96 : vector<8x128xi1>, vector<8x128xf32>
    %cst_22 = arith.constant dense<0.000000e+00> : vector<8xf32>
    %98 = vector.multi_reduction <add>, %97, %cst_22 [1] : vector<8x128xf32> to vector<8xf32>
    %99 = vector.shape_cast %98 : vector<8xf32> to vector<8x1xf32>
    %cst_23 = arith.constant 3.125000e-02 : f32
    %100 = vector.broadcast %cst_23 : f32 to vector<8x1xf32>
    %101 = arith.mulf %99, %100 : vector<8x1xf32>
    %cst_24 = arith.constant 9.99999974E-6 : f32
    %102 = vector.broadcast %cst_24 : f32 to vector<8x1xf32>
    %103 = arith.addf %101, %102 : vector<8x1xf32>
    %104 = math.rsqrt %103 : vector<8x1xf32>
    %105 = vector.shape_cast %11 : vector<1x128xi1> to vector<1x128xi1>
    %106 = vector.broadcast %105 : vector<1x128xi1> to vector<8x128xi1>
    %107 = vector.shape_cast %104 : vector<8x1xf32> to vector<8x1xf32>
    %108 = vector.broadcast %107 : vector<8x1xf32> to vector<8x128xf32>
    %109 = arith.select %106, %108, %93 : vector<8x128xi1>, vector<8x128xf32>
    %cst_25 = arith.constant 0.000000e+00 : f32
    %110 = vector.shape_cast %16 : vector<1x128xi1> to vector<1x128xi1>
    %111 = vector.broadcast %110 : vector<1x128xi1> to vector<8x128xi1>
    %112 = vector.broadcast %cst_25 : f32 to vector<8x128xf32>
    %113 = arith.select %111, %76, %112 : vector<8x128xi1>, vector<8x128xf32>
    %cst_26 = arith.constant dense<0.000000e+00> : vector<8xf32>
    %114 = vector.multi_reduction <add>, %113, %cst_26 [1] : vector<8x128xf32> to vector<8xf32>
    %115 = vector.shape_cast %114 : vector<8xf32> to vector<8x1xf32>
    %cst_27 = arith.constant 3.125000e-02 : f32
    %116 = vector.broadcast %cst_27 : f32 to vector<8x1xf32>
    %117 = arith.mulf %115, %116 : vector<8x1xf32>
    %cst_28 = arith.constant 9.99999974E-6 : f32
    %118 = vector.broadcast %cst_28 : f32 to vector<8x1xf32>
    %119 = arith.addf %117, %118 : vector<8x1xf32>
    %120 = math.rsqrt %119 : vector<8x1xf32>
    %121 = vector.shape_cast %16 : vector<1x128xi1> to vector<1x128xi1>
    %122 = vector.broadcast %121 : vector<1x128xi1> to vector<8x128xi1>
    %123 = vector.shape_cast %120 : vector<8x1xf32> to vector<8x1xf32>
    %124 = vector.broadcast %123 : vector<8x1xf32> to vector<8x128xf32>
    %125 = arith.select %122, %124, %109 : vector<8x128xi1>, vector<8x128xf32>
    %cst_29 = arith.constant 0.000000e+00 : f32
    %126 = vector.shape_cast %21 : vector<1x128xi1> to vector<1x128xi1>
    %127 = vector.broadcast %126 : vector<1x128xi1> to vector<8x128xi1>
    %128 = vector.broadcast %cst_29 : f32 to vector<8x128xf32>
    %129 = arith.select %127, %76, %128 : vector<8x128xi1>, vector<8x128xf32>
    %cst_30 = arith.constant dense<0.000000e+00> : vector<8xf32>
    %130 = vector.multi_reduction <add>, %129, %cst_30 [1] : vector<8x128xf32> to vector<8xf32>
    %131 = vector.shape_cast %130 : vector<8xf32> to vector<8x1xf32>
    %cst_31 = arith.constant 3.125000e-02 : f32
    %132 = vector.broadcast %cst_31 : f32 to vector<8x1xf32>
    %133 = arith.mulf %131, %132 : vector<8x1xf32>
    %cst_32 = arith.constant 9.99999974E-6 : f32
    %134 = vector.broadcast %cst_32 : f32 to vector<8x1xf32>
    %135 = arith.addf %133, %134 : vector<8x1xf32>
    %136 = math.rsqrt %135 : vector<8x1xf32>
    %137 = vector.shape_cast %21 : vector<1x128xi1> to vector<1x128xi1>
    %138 = vector.broadcast %137 : vector<1x128xi1> to vector<8x128xi1>
    %139 = vector.shape_cast %136 : vector<8x1xf32> to vector<8x1xf32>
    %140 = vector.broadcast %139 : vector<8x1xf32> to vector<8x128xf32>
    %141 = arith.select %138, %140, %125 : vector<8x128xi1>, vector<8x128xf32>
    %142 = arith.mulf %75, %141 : vector<8x128xf32>
    %c0_33 = arith.constant 0 : index
    %c0_34 = arith.constant 0 : index
    %143 = vector.load %arg2[%c0_33, %c0_34] : memref<1x128xf32, #tpu.memory_space<vmem>>, vector<1x128xf32>
    %144 = vector.broadcast %143 : vector<1x128xf32> to vector<8x128xf32>
    %145 = arith.mulf %144, %142 : vector<8x128xf32>
    %c0_35 = arith.constant 0 : index
    %c0_36 = arith.constant 0 : index
    %146 = vector.load %arg3[%c0_35, %c0_36] : memref<1x128xf32, #tpu.memory_space<vmem>>, vector<1x128xf32>
    %147 = vector.broadcast %146 : vector<1x128xf32> to vector<8x128xf32>
    %148 = arith.addf %145, %147 : vector<8x128xf32>
    %c0_37 = arith.constant 0 : index
    %c0_38 = arith.constant 0 : index
    %149 = vector.load %arg4[%c0_37, %c0_38] : memref<8x128xf32, #tpu.memory_space<vmem>>, vector<8x128xf32>
    tpu.vector_store %arg4[%c0_37, %c0_38], %148 {strides = array<i32>} : memref<8x128xf32, #tpu.memory_space<vmem>>, vector<8x128xf32>,
    return
  }
  func.func @transform_0(%arg0: i32) -> (i32, i32) {
    %c0_i32 = arith.constant 0 : i32
    %c0_i32_0 = arith.constant 0 : i32
    return %arg0, %c0_i32 : i32, i32
  }
  func.func @transform_1(%arg0: i32) -> (i32, i32) {
    %c0_i32 = arith.constant 0 : i32
    %c0_i32_0 = arith.constant 0 : i32
    %c0_i32_1 = arith.constant 0 : i32
    return %c0_i32, %c0_i32_0 : i32, i32
  }
  func.func @transform_2(%arg0: i32) -> (i32, i32) {
    %c0_i32 = arith.constant 0 : i32
    %c0_i32_0 = arith.constant 0 : i32
    %c0_i32_1 = arith.constant 0 : i32
    return %c0_i32, %c0_i32_0 : i32, i32
  }
  func.func @transform_3(%arg0: i32) -> (i32, i32) {
    %c0_i32 = arith.constant 0 : i32
    %c0_i32_0 = arith.constant 0 : i32
    return %arg0, %c0_i32 : i32, i32
  }
}

</mosaic_0001>

<llo_original>
// kernel: tpu_custom_call.1
$region0: #{tpu_custom_call.1}
  #allocation0 [shape = 'u32[]', space=smem, size = 0x4, offset = 0x4, fixed_abs, tag = 'smem constant byte address 0x4 - core index']
  #allocation1 [shape = 'u32[72,128]{1,0:T(1,128)}', space=vmem, size = 0x9000, scoped, tag = 'internal scratch']
  %s0 = inlined_call_operand.hbm [shape: f32[8,128], index: 0, kind: input, shape index: {}]
  %s1 = inlined_call_operand.hbm [shape: f32[1,128], index: 1, kind: input, shape index: {}]
  %s2 = inlined_call_operand.vmem [shape: f32[1,128], index: 2, kind: input, shape index: {}]
  %s3 = inlined_call_operand.hbm [shape: f32[8,128], index: 3, kind: output, shape index: {}]
  %s4 = sld [smem:[#allocation0]]
  $region30: #{tpu_custom_call.1} parent=0
    _
  %s6 = ssub.s32 1, %s4
  %s7 = scalar_select 0, %s6, %s4
  $region1: #{tpu_custom_call.1} parent=0
    #allocation2 [shape = 'u8[4096]{0}', space=vmem, size = 0x1000, scoped, tag = 'input window, operand 0, single buffered']
    #allocation3 [shape = 's32[1]{0}', space=sflag, size = 0x4, scoped, tag = 'scoped memory for tpu_custom_call.1']
    #allocation4 [shape = 's32[1]{0}', space=sflag, size = 0x4, scoped, tag = 'scoped memory for tpu_custom_call.1']
    #allocation5 [shape = 'u8[512]{0}', space=vmem, size = 0x400, scoped, tag = 'input window, operand 1, single buffered']
    #allocation6 [shape = 's32[1]{0}', space=sflag, size = 0x4, scoped, tag = 'scoped memory for tpu_custom_call.1']
    #allocation7 [shape = 'u8[4096]{0}', space=vmem, size = 0x1000, scoped, tag = 'output window, operand 0, single buffered']
    %8 = vsyncpa [#allocation3], 0
    %9 = vsyncpa [#allocation6], 0
    %10 = vsyncpa [#allocation4], 0
    // Predicated region
    $region2: #{tpu_custom_call.1} parent=1 // pred_check
      _
    $region3: #{tpu_custom_call.1} parent=1 // pred_check_branch
      %12 = sbr.rel (0) target = $region5
    $region4: #{tpu_custom_call.1} parent=1 // pred_region
      %14 = vsyncadd [#allocation3], 0
      %s16 = sshll.u32 %s0, 4
      %s17 = int_to_ptr.hbm [resolvable:$true] %s16
      %s18 = sshll.u32 [#allocation2], 4
      %s19 = int_to_ptr.vmem [resolvable:$true] %s18
      %21 = dma.hbm_to_vmem [thread:$0]  %s17, 128, %s19, [#allocation3]
    $region5: #{tpu_custom_call.1} parent=1 // pred_fallthru
      _
    // Predicated region
    $region6: #{tpu_custom_call.1} parent=1 // pred_check
      _
    $region7: #{tpu_custom_call.1} parent=1 // pred_check_branch
      %23 = sbr.rel (0) target = $region9
    $region8: #{tpu_custom_call.1} parent=1 // pred_region
      %25 = vsyncadd [#allocation6], 0
      %s27 = sshll.u32 %s1, 4
      %s28 = int_to_ptr.hbm [resolvable:$true] %s27
      %s29 = sshll.u32 [#allocation5], 4
      %s30 = int_to_ptr.vmem [resolvable:$true] %s29
      %32 = dma.hbm_to_vmem [thread:$0]  %s28, 16, %s30, [#allocation6]
    $region9: #{tpu_custom_call.1} parent=1 // pred_fallthru
      _
    // Predicated region
    $region10: #{tpu_custom_call.1} parent=1 // pred_check
      _
    $region11: #{tpu_custom_call.1} parent=1 // pred_check_branch
      %34 = sbr.rel (0) target = $region13
    $region12: #{tpu_custom_call.1} parent=1 // pred_region
      _
    $region13: #{tpu_custom_call.1} parent=1 // pred_fallthru
      _
    // Predicated region
    $region14: #{tpu_custom_call.1} parent=1 // pred_check
      _
    $region15: #{tpu_custom_call.1} parent=1 // pred_check_branch
      %36 = sbr.rel (0) target = $region17
    $region16: #{tpu_custom_call.1} parent=1 // pred_region
      %38 = dma.done [#allocation3], 128
    $region17: #{tpu_custom_call.1} parent=1 // pred_fallthru
      _
    // Predicated region
    $region18: #{tpu_custom_call.1} parent=1 // pred_check
      _
    $region19: #{tpu_custom_call.1} parent=1 // pred_check_branch
      %40 = sbr.rel (0) target = $region21
    $region20: #{tpu_custom_call.1} parent=1 // pred_region
      %42 = dma.done [#allocation6], 16
    $region21: #{tpu_custom_call.1} parent=1 // pred_fallthru
      _
    %v43 = vld [vmem:[#allocation2] sm:$0xff]
    %v44 = vlaneseq
    %v45 = vand.u32 %v44, 127
    %vm46 = vcmp.ge.s32.totalorder %v45, 0
    %vm47 = vcmp.lt.s32.totalorder %v45, 32
    %vm48 = vmand %vm46, %vm47
    %vm49 = vcmp.ge.s32.totalorder %v45, 32
    %vm50 = vcmp.lt.s32.totalorder %v45, 64
    %vm51 = vmand %vm49, %vm50
    %vm52 = vcmp.ge.s32.totalorder %v45, 64
    %vm53 = vcmp.lt.s32.totalorder %v45, 96
    %vm54 = vmand %vm52, %vm53
    %vm55 = vcmp.ge.s32.totalorder %v45, 96
    %vm56 = vcmp.lt.s32.totalorder %v45, 128
    %vm57 = vmand %vm55, %vm56
    %v58 = vsel %vm48, 1, 0
    %vm59 = vcmp.eq.s32.totalorder %v58, 1
    %v60 = vsel %vm59, %v43, 0.0
    %61 = vadd.xlane.f32.xlu0 %v60
    %v62 = vpop.xlane.xlu0 %61
    %v63 = vmul.f32 %v62, 0.03125
    %v64 = vsel %vm59, %v63, 0.0
    %v65 = vsel %vm51, 1, 0
    %vm66 = vcmp.eq.s32.totalorder %v65, 1
    %v67 = vsel %vm66, %v43, 0.0
    %68 = vadd.xlane.f32.xlu0 %v67
    %v69 = vpop.xlane.xlu0 %68
    %v70 = vmul.f32 %v69, 0.03125
    %v71 = vsel %vm66, %v70, %v64
    %v72 = vsel %vm54, 1, 0
    %vm73 = vcmp.eq.s32.totalorder %v72, 1
    %v74 = vsel %vm73, %v43, 0.0
    %75 = vadd.xlane.f32.xlu0 %v74
    %v76 = vpop.xlane.xlu0 %75
    %v77 = vmul.f32 %v76, 0.03125
    %v78 = vsel %vm73, %v77, %v71
    %v79 = vsel %vm57, 1, 0
    %vm80 = vcmp.eq.s32.totalorder %v79, 1
    %v81 = vsel %vm80, %v43, 0.0
    %82 = vadd.xlane.f32.xlu0 %v81
    %v83 = vpop.xlane.xlu0 %82
    %v84 = vmul.f32 %v83, 0.03125
    %v85 = vsel %vm80, %v84, %v78
    %v86 = vsub.f32 %v43, %v85
    %v87 = vmul.f32 %v86, %v86
    %v88 = vsel %vm59, %v87, 0.0
    %89 = vadd.xlane.f32.xlu0 %v88
    %v90 = vpop.xlane.xlu0 %89
    %v91 = vmul.f32 %v90, 0.03125
    %v92 = vadd.f32 %v91, 1e-05
    %v93 = vrsqrt.pop %v92
    %v94 = vmul.f32 %v93, %v92
    %v95 = vmul.f32 %v94, %v93
    %v96 = vmul.f32 0.5, %v95
    %v97 = vsub.f32 1.5, %v96
    %v98 = vmul.f32 %v93, %v97
    %vm99 = vweird.f32 %v92
    %vm100 = vweird.f32 %v93
    %vm101 = vmor %vm99, %vm100
    %v102 = vsel %vm101, %v93, %v98
    %v103 = vsel %vm59, %v102, 0.0
    %v104 = vsel %vm66, %v87, 0.0
    %105 = vadd.xlane.f32.xlu0 %v104
    %v106 = vpop.xlane.xlu0 %105
    %v107 = vmul.f32 %v106, 0.03125
    %v108 = vadd.f32 %v107, 1e-05
    %v109 = vrsqrt.pop %v108
    %v110 = vmul.f32 %v109, %v108
    %v111 = vmul.f32 %v110, %v109
    %v112 = vmul.f32 0.5, %v111
    %v113 = vsub.f32 1.5, %v112
    %v114 = vmul.f32 %v109, %v113
    %vm115 = vweird.f32 %v108
    %vm116 = vweird.f32 %v109
    %vm117 = vmor %vm115, %vm116
    %v118 = vsel %vm117, %v109, %v114
    %v119 = vsel %vm66, %v118, %v103
    %v120 = vsel %vm73, %v87, 0.0
    %121 = vadd.xlane.f32.xlu0 %v120
    %v122 = vpop.xlane.xlu0 %121
    %v123 = vmul.f32 %v122, 0.03125
    %v124 = vadd.f32 %v123, 1e-05
    %v125 = vrsqrt.pop %v124
    %v126 = vmul.f32 %v125, %v124
    %v127 = vmul.f32 %v126, %v125
    %v128 = vmul.f32 0.5, %v127
    %v129 = vsub.f32 1.5, %v128
    %v130 = vmul.f32 %v125, %v129
    %vm131 = vweird.f32 %v124
    %vm132 = vweird.f32 %v125
    %vm133 = vmor %vm131, %vm132
    %v134 = vsel %vm133, %v125, %v130
    %v135 = vsel %vm73, %v134, %v119
    %v136 = vsel %vm80, %v87, 0.0
    %137 = vadd.xlane.f32.xlu0 %v136
    %v138 = vpop.xlane.xlu0 %137
    %v139 = vmul.f32 %v138, 0.03125
    %v140 = vadd.f32 %v139, 1e-05
    %v141 = vrsqrt.pop %v140
    %v142 = vmul.f32 %v141, %v140
    %v143 = vmul.f32 %v142, %v141
    %v144 = vmul.f32 0.5, %v143
    %v145 = vsub.f32 1.5, %v144
    %v146 = vmul.f32 %v141, %v145
    %vm147 = vweird.f32 %v140
    %vm148 = vweird.f32 %v141
    %vm149 = vmor %vm147, %vm148
    %v150 = vsel %vm149, %v141, %v146
    %v151 = vsel %vm80, %v150, %v135
    %v152 = vmul.f32 %v86, %v151
    %v153 = vld [vmem:[#allocation5] sm:$0x1]
    %v155 = vperm.slane %v153, 0
    %v157 = vmul.f32 %v155, %v152
    %v158 = vld [vmem:[%s2] sm:$0x1]
    %v160 = vperm.slane %v158, 0
    %v162 = vadd.f32 %v157, %v160
    %163 = vst [vmem:[#allocation7] sm:$0xff] %v162
    // Predicated region
    $region22: #{tpu_custom_call.1} parent=1 // pred_check
      _
    $region23: #{tpu_custom_call.1} parent=1 // pred_check_branch
      %165 = sbr.rel (0) target = $region25
    $region24: #{tpu_custom_call.1} parent=1 // pred_region
      %167 = vsyncadd [#allocation4], 0
      %s169 = sshll.u32 [#allocation7], 4
      %s170 = int_to_ptr.vmem [resolvable:$true] %s169
      %s171 = sshll.u32 %s3, 4
      %s172 = int_to_ptr.hbm [resolvable:$true] %s171
      %174 = dma.vmem_to_hbm [thread:$0]  %s170, 128, %s172, [#allocation4]
    $region25: #{tpu_custom_call.1} parent=1 // pred_fallthru
      _
    // Predicated region
    $region26: #{tpu_custom_call.1} parent=1 // pred_check
      _
    $region27: #{tpu_custom_call.1} parent=1 // pred_check_branch
      %176 = sbr.rel (0) target = $region29
    $region28: #{tpu_custom_call.1} parent=1 // pred_region
      %178 = dma.done [#allocation4], 128
    $region29: #{tpu_custom_call.1} parent=1 // pred_fallthru
      _
    %179 = vsyncpa [#allocation3], 1
    %180 = vsyncpa [#allocation6], 1
    %181 = vsyncpa [#allocation4], 1

</llo_original>
